<compile_context>
chip_gen: v7x
topology: tpu7x:2x2x1
jax: 0.10.0
libtpu: 0.0.40
codegen_flags: <defaults>
</compile_context>

<pallas_src>
import jax
import jax.numpy as jnp
from jax.experimental import pallas as pl
from jax.experimental.pallas import tpu as pltpu


def _cdiv(a, b):
    return -(-a // b)


def _attention_kernel(x_ref, wa_ref, v_ref, ctx_ref, scores_ref):
    # x_ref:      (TB, S, E)  tile of batch rows (un-padded)
    # wa_ref:     (E, D)      attn weight (== nn.Linear(E, D).weight.T)
    # v_ref:      (1, D)      v weight as a lane-dense row
    # ctx_ref:    (TB, E)     weighted sum over the sequence
    # scores_ref: (TB, S)     softmax scores (S on the lane axis)
    TB, S, E = x_ref.shape
    D = wa_ref.shape[1]

    x = x_ref[...].astype(jnp.float32)                      # (TB, S, E)
    x2 = x.reshape(TB * S, E)                                # real-M MXU matmul

    # energy = tanh(x @ Wa)  -> (TB*S, D)    (MXU matmul, EUP tanh)
    energy = jnp.tanh(
        jnp.dot(x2, wa_ref[...].astype(jnp.float32),
                preferred_element_type=jnp.float32))

    # logits = energy . v  via VPU broadcast-multiply + lane reduce
    # (keeps the MXU free of an N=1 matmul).
    v_row = v_ref[...].astype(jnp.float32).reshape(1, 1, D)
    logits = jnp.sum(energy.reshape(TB, S, D) * v_row, axis=-1)   # (TB, S)

    # Softmax over the sequence (lane) axis, f32 statistics.
    m = jnp.max(logits, axis=-1, keepdims=True)              # (TB, 1)
    e = jnp.exp(logits - m)                                   # (TB, S)
    denom = jnp.sum(e, axis=-1, keepdims=True)                # (TB, 1)
    scores = e * pl.reciprocal(denom, approx=False)           # exact: 1e-5 tol

    scores_ref[...] = scores.astype(scores_ref.dtype)
    # TODO(synk): when S < 128, a 128-lane zero-padded scores slab would turn
    # this into an unmasked vst; skipped here to avoid unaligned lane-concat
    # lowering risk (scores traffic is ~1/E of the input traffic anyway).

    # ctx[b,:] = scores[b,:] @ x[b,:,:]  -- batched MXU contraction over S,
    # avoids materializing a (TB, S, E) x*scores temp and a sublane reduce.
    ctx = jnp.einsum("bqs,bse->bqe", scores[:, None, :], x,
                     preferred_element_type=jnp.float32)[:, 0, :]
    ctx_ref[...] = ctx.astype(ctx_ref.dtype)


def _tpu_vmem_capacity_bytes():
    try:
        return int(pltpu.get_tpu_info().vmem_capacity_bytes)
    except Exception:
        return 64 * 1024 * 1024   # conservative (v7x per-core VMEM)


def _num_tensorcores_per_chip():
    # Only v7x has 2 TensorCores per chip; on v5e/v6e the grid is a serial
    # loop, so splitting would just shrink the tile for zero parallelism.
    try:
        if "v7" in jax.devices()[0].device_kind.lower():
            return 2
    except Exception:
        pass
    return 1


def _pick_batch_tile(B, S, E, D, vmem_budget, n_cores):
    # Live f32 bytes per batch row inside one grid step (pipeline double-buffers
    # the tiled input/outputs).
    per_row = (2 * S * E * 4      # x tile (2 pipeline buffers)
               + S * D * 4        # energy temp
               + 4 * S * 4        # logits / exp / scores temps
               + 2 * E * 4        # ctx out (2 buffers)
               + 2 * S * 4)       # scores out (2 buffers)
    tb = max(1, min(B, vmem_budget // max(per_row, 1)))
    if n_cores > 1 and B >= n_cores:
        tb = min(tb, _cdiv(B, n_cores))    # >=1 grid step per TensorCore (v7x)
    while B % tb:                          # largest divisor of B <= tb: exact
        tb -= 1                            # tiles -> no HBM zero-pad of inputs
    return tb


def attention_forward(enc_output, w_attn, v_w):
    """enc_output: [B, S, E] float32
       w_attn:     [E, D]    (== nn.Linear(E, D).weight.T)
       v_w:        [D, 1]    (== nn.Linear(D, 1).weight.T)
       returns (ctx [B, E], scores [B, S, 1])"""
    B, S, E = enc_output.shape
    D = w_attn.shape[1]

    vmem_cap = _tpu_vmem_capacity_bytes()
    vmem_limit = int(vmem_cap * 0.75)          # lift the default scoped limit
    n_cores = _num_tensorcores_per_chip()
    weight_bytes = 2 * (E * D + D) * 4         # resident weights (double-buffered)
    budget = max(1, int(vmem_limit * 0.7) - weight_bytes)
    tb = _pick_batch_tile(B, S, E, D, budget, n_cores)
    n_steps = B // tb

    v_row = v_w.reshape(1, D)                  # lane-dense v row (tiny)

    flops = 2 * B * S * E * D + 2 * B * S * D + 2 * B * S * E
    transcendentals = B * S * D + B * S        # tanh + exp
    bytes_accessed = 4 * (B * S * E + E * D + D + B * E + B * S)

    grid_spec = pltpu.PrefetchScalarGridSpec(
        num_scalar_prefetch=0,
        grid=(n_steps,),
        in_specs=[
            # Full (un-padded) S and E dims; only the batch axis is tiled,
            # so enc_output is read straight from HBM with no pad copy.
            pl.BlockSpec((tb, S, E), lambda b: (b, 0, 0)),
            pl.BlockSpec((E, D), lambda b: (0, 0)),    # resident attn weight
            pl.BlockSpec((1, D), lambda b: (0, 0)),    # resident v row
        ],
        out_specs=[
            pl.BlockSpec((tb, E), lambda b: (b, 0)),   # ctx
            pl.BlockSpec((tb, S), lambda b: (b, 0)),   # scores (lane-dense)
        ],
    )

    ctx, scores_2d = pl.pallas_call(
        _attention_kernel,
        out_shape=(
            jax.ShapeDtypeStruct((B, E), enc_output.dtype),
            jax.ShapeDtypeStruct((B, S), enc_output.dtype),
        ),
        grid_spec=grid_spec,
        compiler_params=pltpu.CompilerParams(
            dimension_semantics=("parallel",),
            vmem_limit_bytes=vmem_limit),
        cost_estimate=pl.CostEstimate(
            flops=flops,
            transcendentals=transcendentals,
            bytes_accessed=bytes_accessed),
    )(enc_output, w_attn, v_row)

    scores = scores_2d.reshape(B, S, 1)        # PyTorch layout (B, S, 1)
    return ctx, scores
    # TODO(synk): for very long S (esp. v7x's 64 MiB VMEM), add a second
    # 'arbitrary' grid axis over S-chunks with an online softmax (running
    # max/sum VMEM scratch) and a ctx accumulator so VMEM stays bounded
    # independent of sequence length.


def _reference(enc_output, w_attn, v_w):
    energy = jnp.tanh(enc_output @ w_attn)                 # (B, S, D)
    att = energy @ v_w                                     # (B, S, 1)
    scores = jax.nn.softmax(att, axis=1)
    out = jnp.sum(enc_output * scores, axis=1)             # (B, E)
    return out, scores


if __name__ == "__main__":
    B, S, E, D = 2, 8, 32, 32   # batch, seq, enc_hid_dim, dec_hid_dim

    key = jax.random.PRNGKey(0)
    k1, k2, k3 = jax.random.split(key, 3)

    enc_output = jax.random.normal(k1, (B, S, E), dtype=jnp.float32)
    # nn.Linear(E, D).weight is (D, E); we keep it stored transposed as (E, D).
    w_attn = (jax.random.uniform(k2, (E, D), dtype=jnp.float32) - 0.5) * (2.0 / jnp.sqrt(E))
    v_w = (jax.random.uniform(k3, (D, 1), dtype=jnp.float32) - 0.5) * (2.0 / jnp.sqrt(D))

    ctx, scores = attention_forward(enc_output, w_attn, v_w)
    jax.block_until_ready((ctx, scores))

    ref_ctx, ref_scores = _reference(enc_output, w_attn, v_w)
    assert jnp.allclose(ctx, ref_ctx, atol=1e-5, rtol=1e-5)
    assert jnp.allclose(scores, ref_scores, atol=1e-5, rtol=1e-5)

    print("KERNEL_OK")
</pallas_src>

<mosaic_0001>
module attributes {stable_mosaic.version = 11 : i64} {
  func.func @_attention_kernel(%arg0: i32, %arg1: memref<2x8x32xf32, #tpu.memory_space<vmem>>, %arg2: memref<32x32xf32, #tpu.memory_space<vmem>>, %arg3: memref<1x32xf32, #tpu.memory_space<vmem>>, %arg4: memref<2x32xf32, #tpu.memory_space<vmem>>, %arg5: memref<2x8xf32, #tpu.memory_space<vmem>>) attributes {dimension_semantics = [#tpu.dimension_semantics<parallel>], iteration_bounds = array<i64: 1>, scalar_prefetch = 0 : i64, scratch_operands = 0 : i64, tpu.core_type = #tpu.core_type<tc>, window_params = [{transform_indices = @transform_0, window_bounds = array<i64: 2, 8, 32>}, {pipeline_mode = #tpu.pipeline_mode<synchronous>, transform_indices = @transform_1, window_bounds = array<i64: 32, 32>}, {pipeline_mode = #tpu.pipeline_mode<synchronous>, transform_indices = @transform_2, window_bounds = array<i64: 1, 32>}, {transform_indices = @transform_3, window_bounds = array<i64: 2, 32>}, {transform_indices = @transform_4, window_bounds = array<i64: 2, 8>}]} {
    %c0 = arith.constant 0 : index
    %c0_0 = arith.constant 0 : index
    %c0_1 = arith.constant 0 : index
    %0 = vector.load %arg1[%c0, %c0_0, %c0_1] : memref<2x8x32xf32, #tpu.memory_space<vmem>>, vector<2x8x32xf32>
    %1 = vector.shape_cast %0 : vector<2x8x32xf32> to vector<16x32xf32>
    %c0_2 = arith.constant 0 : index
    %c0_3 = arith.constant 0 : index
    %2 = vector.load %arg2[%c0_2, %c0_3] : memref<32x32xf32, #tpu.memory_space<vmem>>, vector<32x32xf32>
    %cst = arith.constant dense<0.000000e+00> : vector<16x32xf32>
    %3 = tpu.matmul %1, %2, %cst {dimension_numbers = #tpu.dot_dimension_numbers<[1], [0], [0], [1], [0, 0, 1, 1], [], []>} : vector<16x32xf32>, vector<32x32xf32>, vector<16x32xf32> -> vector<16x32xf32>
    %4 = math.tanh %3 : vector<16x32xf32>
    %c0_4 = arith.constant 0 : index
    %c0_5 = arith.constant 0 : index
    %5 = vector.load %arg3[%c0_4, %c0_5] : memref<1x32xf32, #tpu.memory_space<vmem>>, vector<1x32xf32>
    %6 = vector.shape_cast %5 : vector<1x32xf32> to vector<1x1x32xf32>
    %7 = vector.shape_cast %4 : vector<16x32xf32> to vector<2x8x32xf32>
    %8 = vector.broadcast %6 : vector<1x1x32xf32> to vector<2x8x32xf32>
    %9 = arith.mulf %7, %8 : vector<2x8x32xf32>
    %cst_6 = arith.constant dense<0.000000e+00> : vector<2x8xf32>
    %10 = vector.multi_reduction <add>, %9, %cst_6 [2] : vector<2x8x32xf32> to vector<2x8xf32>
    %cst_7 = arith.constant dense<0xFF800000> : vector<2xf32>
    %11 = vector.multi_reduction <maximumf>, %10, %cst_7 [1] : vector<2x8xf32> to vector<2xf32>
    %12 = vector.shape_cast %11 : vector<2xf32> to vector<2x1xf32>
    %13 = vector.broadcast %12 : vector<2x1xf32> to vector<2x8xf32>
    %14 = arith.subf %10, %13 : vector<2x8xf32>
    %15 = math.exp %14 : vector<2x8xf32>
    %cst_8 = arith.constant dense<0.000000e+00> : vector<2xf32>
    %16 = vector.multi_reduction <add>, %15, %cst_8 [1] : vector<2x8xf32> to vector<2xf32>
    %17 = vector.shape_cast %16 : vector<2xf32> to vector<2x1xf32>
    %18 = tpu.reciprocal %17 : vector<2x1xf32> -> vector<2x1xf32>
    %19 = vector.broadcast %18 : vector<2x1xf32> to vector<2x8xf32>
    %20 = arith.mulf %15, %19 : vector<2x8xf32>
    %c0_9 = arith.constant 0 : index
    %c0_10 = arith.constant 0 : index
    %21 = vector.load %arg5[%c0_9, %c0_10] : memref<2x8xf32, #tpu.memory_space<vmem>>, vector<2x8xf32>
    tpu.vector_store %arg5[%c0_9, %c0_10], %20 {strides = array<i32>} : memref<2x8xf32, #tpu.memory_space<vmem>>, vector<2x8xf32>,
    %22 = vector.shape_cast %20 : vector<2x8xf32> to vector<2x1x8xf32>
    "tpu.trace_start"() <{level = 10 : i32, message = "bqs,bse->bqe"}> : () -> ()
    %cst_11 = arith.constant dense<0.000000e+00> : vector<2x1x32xf32>
    %23 = tpu.matmul %22, %0, %cst_11 {dimension_numbers = #tpu.dot_dimension_numbers<[2], [1], [1], [2], [0, 0, 0, 1, 1, 2], [0], [0]>} : vector<2x1x8xf32>, vector<2x8x32xf32>, vector<2x1x32xf32> -> vector<2x1x32xf32>
    "tpu.trace_stop"() : () -> ()
    %24 = vector.shape_cast %23 : vector<2x1x32xf32> to vector<2x32xf32>
    %c0_12 = arith.constant 0 : index
    %c0_13 = arith.constant 0 : index
    %25 = vector.load %arg4[%c0_12, %c0_13] : memref<2x32xf32, #tpu.memory_space<vmem>>, vector<2x32xf32>
    tpu.vector_store %arg4[%c0_12, %c0_13], %24 {strides = array<i32>} : memref<2x32xf32, #tpu.memory_space<vmem>>, vector<2x32xf32>,
    return
  }
  func.func @transform_0(%arg0: i32) -> (i32, i32, i32) {
    %c0_i32 = arith.constant 0 : i32
    %c0_i32_0 = arith.constant 0 : i32
    %c0_i32_1 = arith.constant 0 : i32
    return %arg0, %c0_i32, %c0_i32_0 : i32, i32, i32
  }
  func.func @transform_1(%arg0: i32) -> (i32, i32) {
    %c0_i32 = arith.constant 0 : i32
    %c0_i32_0 = arith.constant 0 : i32
    %c0_i32_1 = arith.constant 0 : i32
    return %c0_i32, %c0_i32_0 : i32, i32
  }
  func.func @transform_2(%arg0: i32) -> (i32, i32) {
    %c0_i32 = arith.constant 0 : i32
    %c0_i32_0 = arith.constant 0 : i32
    %c0_i32_1 = arith.constant 0 : i32
    return %c0_i32, %c0_i32_0 : i32, i32
  }
  func.func @transform_3(%arg0: i32) -> (i32, i32) {
    %c0_i32 = arith.constant 0 : i32
    %c0_i32_0 = arith.constant 0 : i32
    return %arg0, %c0_i32 : i32, i32
  }
  func.func @transform_4(%arg0: i32) -> (i32, i32) {
    %c0_i32 = arith.constant 0 : i32
    %c0_i32_0 = arith.constant 0 : i32
    return %arg0, %c0_i32 : i32, i32
  }
}

</mosaic_0001>

<llo_original>
// kernel: tpu_custom_call.1
$region0: #{tpu_custom_call.1}
  #allocation0 [shape = 'u32[]', space=smem, size = 0x4, offset = 0x4, fixed_abs, tag = 'smem constant byte address 0x4 - core index']
  #allocation1 [shape = 'u32[144,128]{1,0:T(1,128)}', space=vmem, size = 0x12000, scoped, tag = 'internal scratch']
  %s0 = inlined_call_operand.hbm [shape: f32[2,8,32], index: 0, kind: input, shape index: {}]
  %s1 = inlined_call_operand.hbm [shape: f32[32,32], index: 1, kind: input, shape index: {}]
  %s2 = inlined_call_operand.vmem [shape: f32[1,32], index: 2, kind: input, shape index: {}]
  %s3 = inlined_call_operand.hbm [shape: f32[2,32], index: 3, kind: output, shape index: {0}]
  %s4 = inlined_call_operand.hbm [shape: f32[2,8], index: 4, kind: output, shape index: {1}]
  %5 = xla_tuple %s3, %s4
  %s6 = sld [smem:[#allocation0]]
  $region38: #{tpu_custom_call.1} parent=0
    _
  %s8 = ssub.s32 1, %s6
  %s9 = scalar_select 0, %s8, %s6
  $region1: #{tpu_custom_call.1} parent=0
    #allocation2 [shape = 'u8[8192]{0}', space=vmem, size = 0x2000, scoped, tag = 'input window, operand 0, single buffered']
    #allocation3 [shape = 's32[1]{0}', space=sflag, size = 0x4, scoped, tag = 'scoped memory for tpu_custom_call.1']
    #allocation4 [shape = 's32[1]{0}', space=sflag, size = 0x4, scoped, tag = 'scoped memory for tpu_custom_call.1']
    #allocation5 [shape = 'u8[16384]{0}', space=vmem, size = 0x4000, scoped, tag = 'input window, operand 1, single buffered']
    #allocation6 [shape = 's32[1]{0}', space=sflag, size = 0x4, scoped, tag = 'scoped memory for tpu_custom_call.1']
    #allocation7 [shape = 'u8[1024]{0}', space=vmem, size = 0x400, scoped, tag = 'output window, operand 0, single buffered']
    #allocation8 [shape = 'u8[1024]{0}', space=vmem, size = 0x400, scoped, tag = 'output window, operand 1, single buffered']
    #allocation9 [shape = 's32[1]{0}', space=sflag, size = 0x4, scoped, tag = 'scoped memory for tpu_custom_call.1']
    %10 = vsyncpa [#allocation3], 0
    %11 = vsyncpa [#allocation6], 0
    %12 = vsyncpa [#allocation4], 0
    %13 = vsyncpa [#allocation9], 0
    // Predicated region
    $region2: #{tpu_custom_call.1} parent=1 // pred_check
      _
    $region3: #{tpu_custom_call.1} parent=1 // pred_check_branch
      %15 = sbr.rel (0) target = $region5
    $region4: #{tpu_custom_call.1} parent=1 // pred_region
      %s17 = ssub.s32 256, 256
      %18 = vsyncadd [#allocation3], %s17
      %s19 = sshll.u32 [#allocation2], 4
      %s20 = int_to_ptr.vmem [resolvable:$true] %s19
      %25 = dma.hbm_to_vmem [thread:$0]  %s0, 256, %s20, [#allocation3], 128, 128, 8
    $region5: #{tpu_custom_call.1} parent=1 // pred_fallthru
      _
    // Predicated region
    $region6: #{tpu_custom_call.1} parent=1 // pred_check
      _
    $region7: #{tpu_custom_call.1} parent=1 // pred_check_branch
      %27 = sbr.rel (0) target = $region9
    $region8: #{tpu_custom_call.1} parent=1 // pred_region
      %s29 = ssub.s32 512, 512
      %30 = vsyncadd [#allocation6], %s29
      %s31 = sshll.u32 [#allocation5], 4
      %s32 = int_to_ptr.vmem [resolvable:$true] %s31
      %37 = dma.hbm_to_vmem [thread:$0]  %s1, 512, %s32, [#allocation6], 128, 128, 8
    $region9: #{tpu_custom_call.1} parent=1 // pred_fallthru
      _
    // Predicated region
    $region10: #{tpu_custom_call.1} parent=1 // pred_check
      _
    $region11: #{tpu_custom_call.1} parent=1 // pred_check_branch
      %39 = sbr.rel (0) target = $region13
    $region12: #{tpu_custom_call.1} parent=1 // pred_region
      _
    $region13: #{tpu_custom_call.1} parent=1 // pred_fallthru
      _
    // Predicated region
    $region14: #{tpu_custom_call.1} parent=1 // pred_check
      _
    $region15: #{tpu_custom_call.1} parent=1 // pred_check_branch
      %41 = sbr.rel (0) target = $region17
    $region16: #{tpu_custom_call.1} parent=1 // pred_region
      %42 = dma.done [#allocation3], 256
    $region17: #{tpu_custom_call.1} parent=1 // pred_fallthru
      _
    // Predicated region
    $region18: #{tpu_custom_call.1} parent=1 // pred_check
      _
    $region19: #{tpu_custom_call.1} parent=1 // pred_check_branch
      %44 = sbr.rel (0) target = $region21
    $region20: #{tpu_custom_call.1} parent=1 // pred_region
      %45 = dma.done [#allocation6], 512
    $region21: #{tpu_custom_call.1} parent=1 // pred_fallthru
      _
    %v46 = vld [vmem:[#allocation2] sm:$0xff]
    %v47 = vld [vmem:[#allocation2 + $0x8] sm:$0xff]
    %v48 = vld [vmem:[#allocation5] sm:$0xff]
    %v49 = vld [vmem:[#allocation5 + $0x8] sm:$0xff]
    %v50 = vld [vmem:[#allocation5 + $0x10] sm:$0xff]
    %v51 = vld [vmem:[#allocation5 + $0x18] sm:$0xff]
    %vm52 = vcmask 261120
    %v54 = vsel %vm52, %v46, 0
    %v57 = vsel %vm52, %v47, 0
    %59 = vmatprep.subr.mxu0 0.0
    %60 = vmatpush1.msra.mxu0 %v48
    %61 = vmatprep.subr.mxu0 0.0
    %62 = vmatpush1.msra.mxu0 %v49
    %63 = vmatprep.subr.mxu0 0.0
    %64 = vmatpush1.msra.mxu0 %v50
    %65 = vmatprep.subr.mxu0 0.0
    %66 = vmatpush1.msra.mxu0 %v51
    %67 = vmatprep.subr.mxu0 0.0
    %68 = vmatpush1.msra.mxu0 0.0
    %69 = vmatprep.subr.mxu0 0.0
    %70 = vmatpush1.msra.mxu0 0.0
    %71 = vmatprep.subr.mxu0 0.0
    %72 = vmatpush1.msra.mxu0 0.0
    %73 = vmatprep.subr.mxu0 0.0
    %74 = vmatpush1.msra.mxu0 0.0
    %75 = vmatprep.subr.mxu0 0.0
    %76 = vmatpush1.msra.mxu0 0.0
    %77 = vmatprep.subr.mxu0 0.0
    %78 = vmatpush1.msra.mxu0 0.0
    %79 = vmatprep.subr.mxu0 0.0
    %80 = vmatpush1.msra.mxu0 0.0
    %81 = vmatprep.subr.mxu0 0.0
    %82 = vmatpush1.msra.mxu0 0.0
    %83 = vmatprep.subr.mxu0 0.0
    %84 = vmatpush1.msra.mxu0 0.0
    %85 = vmatprep.subr.mxu0 0.0
    %86 = vmatpush1.msra.mxu0 0.0
    %87 = vmatprep.subr.mxu0 0.0
    %88 = vmatpush1.msra.mxu0 0.0
    %89 = vmatprep.subr.mxu0 0.0
    %90 = vmatpush1.msra.mxu0 0.0
    %91 = vmatprep.subr.mxu0 0.0
    %92 = vmatpush1.msra.mxu0 0.0
    %93 = vmatprep.subr.mxu0 0.0
    %94 = vmatpush1.msra.mxu0 0.0
    %95 = vmatprep.subr.mxu0 0.0
    %96 = vmatpush1.msra.mxu0 0.0
    %97 = vmatprep.subr.mxu0 0.0
    %98 = vmatpush1.msra.mxu0 0.0
    %99 = vmatprep.subr.mxu0 0.0
    %100 = vmatpush1.msra.mxu0 0.0
    %101 = vmatprep.subr.mxu0 0.0
    %102 = vmatpush1.msra.mxu0 0.0
    %103 = vmatprep.subr.mxu0 0.0
    %104 = vmatpush1.msra.mxu0 0.0
    %105 = vmatprep.subr.mxu0 0.0
    %106 = vmatpush1.msra.mxu0 0.0
    %107 = vmatprep.subr.mxu0 0.0
    %108 = vmatpush1.msra.mxu0 0.0
    %109 = vmatprep.subr.mxu0 0.0
    %110 = vmatpush1.msra.mxu0 0.0
    %111 = vmatprep.subr.mxu0 0.0
    %112 = vmatpush1.msra.mxu0 0.0
    %113 = vmatprep.subr.mxu0 0.0
    %114 = vmatpush1.msra.mxu0 0.0
    %115 = vmatprep.subr.mxu0 0.0
    %116 = vmatpush1.msra.mxu0 0.0
    %117 = vmatprep.subr.mxu0 0.0
    %118 = vmatpush1.msra.mxu0 0.0
    %119 = vmatprep.subr.mxu0 0.0
    %120 = vmatpush1.msra.mxu0 0.0
    %121 = vmatprep.subr.mxu0 0.0
    %122 = vmatpush1.msra.mxu0 0.0
    %123 = vmatprep.mubr.f32.mxu0 0.0
    %124 = vmatmul.mubr.f32.gmra.mrb[0].mxu0 %v54
    %v125 = vpop.f32.mrb[0].mxu0
    %v126 = vadd.f32 0.0, %v125
    %v127 = vpop.f32.mrb[0].mxu0
    %128 = vmatprep.mubr.f32.mxu0 0.0
    %129 = vmatmul.mubr.f32.gmra.mrb[0].mxu0 %v57
    %v130 = vpop.f32.mrb[0].mxu0
    %v131 = vadd.f32 0.0, %v130
    %v132 = vpop.f32.mrb[0].mxu0
    %133 = vdwg.mxu0
    %v134 = vtanh.pop %v126
    %v135 = vtanh.pop %v131
    %v136 = vld [vmem:[%s2] sm:$0x1]
    %v138 = vlaneseq
    %v139 = vshrl.u32 %v138, 7
    %v140 = vsub.s32 0, %v139
    %v141 = vrot.slane %v136, %v140
    %v143 = vmul.f32 %v134, %v141
    %v144 = vmul.f32 %v135, %v141
    %v145 = vsel %vm52, %v143, 0.0
    %146 = vadd.xlane.f32.xlu0 %v145
    %v147 = vpop.xlane.xlu0 %146
    %v148 = vsel %vm52, %v144, 0.0
    %149 = vadd.xlane.f32.xlu0 %v148
    %v150 = vpop.xlane.xlu0 %149
    %v153 = vlaneseq
    %v154 = vand.u32 %v153, 127
    %v155 = vlaneseq
    %v156 = vshrl.u32 %v155, 7
    %v157 = vsub.s32 %v154, %v156
    %v158 = vrot.slane %v147, %v157
    %v159 = vlaneseq
    %v160 = vshrl.u32 %v159, 7
    %v161 = vsub.s32 %v154, %v160
    %v162 = vrot.slane %v150, %v161
    %vm163 = vcmask 1041409
    %v164 = vsel %vm163, %v162, %v158
    %vm166 = vcmask 58368
    %v167 = vsel %vm166, %v164, -inf
    %168 = vmax.xlane.f32.xlu0 %v167
    %v169 = vpop.xlane.xlu0 %168
    %v171 = vlaneseq
    %v172 = vshrl.u32 %v171, 7
    %v173 = vsub.s32 0, %v172
    %v174 = vrot.slane %v169, %v173
    %v175 = vlaneseq
    %v176 = vshrl.u32 %v175, 7
    %v177 = vsub.s32 1, %v176
    %v178 = vrot.slane %v169, %v177
    %v181 = vsub.f32 %v147, %v174
    %v182 = vsub.f32 %v150, %v178
    %v183 = vmul.f32 %v181, 1.442695
    %v184 = vpow.pop %v183
    %v185 = vmul.f32 %v182, 1.442695
    %v186 = vpow.pop %v185
    %189 = vset.pattern.permute.xlu0 0
    %190 = vperm.xlu0 %189, %v184
    %v191 = vpop.permute.xlu0 %190
    %192 = vset.pattern.permute.xlu0 0
    %193 = vperm.xlu0 %192, %v186
    %v194 = vpop.permute.xlu0 %193
    %v195 = vlaneseq
    %v196 = vshrl.u32 %v195, 7
    %v197 = vsub.s32 %v154, %v196
    %v198 = vrot.slane %v191, %v197
    %v199 = vlaneseq
    %v200 = vshrl.u32 %v199, 7
    %v201 = vsub.s32 %v154, %v200
    %v202 = vrot.slane %v194, %v201
    %v203 = vsel %vm163, %v202, %v198
    %v205 = vsel %vm166, %v203, 0.0
    %206 = vadd.xlane.f32.xlu0 %v205
    %v207 = vpop.xlane.xlu0 %206
    %v208 = vrcp.pop %v207
    %v210 = vlaneseq
    %v211 = vshrl.u32 %v210, 7
    %v212 = vsub.s32 0, %v211
    %v213 = vrot.slane %v208, %v212
    %v214 = vlaneseq
    %v215 = vshrl.u32 %v214, 7
    %v216 = vsub.s32 1, %v215
    %v217 = vrot.slane %v208, %v216
    %v220 = vmul.f32 %v184, %v213
    %v221 = vmul.f32 %v186, %v217
    %224 = vset.pattern.permute.xlu0 0
    %225 = vperm.xlu0 %224, %v220
    %v226 = vpop.permute.xlu0 %225
    %227 = vset.pattern.permute.xlu0 0
    %228 = vperm.xlu0 %227, %v221
    %v229 = vpop.permute.xlu0 %228
    %v230 = vlaneseq
    %v231 = vshrl.u32 %v230, 7
    %v232 = vsub.s32 %v154, %v231
    %v233 = vrot.slane %v226, %v232
    %v234 = vlaneseq
    %v235 = vshrl.u32 %v234, 7
    %v236 = vsub.s32 %v154, %v235
    %v237 = vrot.slane %v229, %v236
    %v238 = vsel %vm163, %v237, %v233
    %240 = vst.msk [vmem:[#allocation8] sm:$0x3] %vm166, %v238
    %vm241 = vcmask 64512
    %v242 = vsel %vm241, %v233, 0
    %244 = vmatprep.subr.mxu0 0.0
    %245 = vmatpush1.msra.mxu0 %v46
    %246 = vmatprep.subr.mxu0 0.0
    %247 = vmatpush1.msra.mxu0 0.0
    %248 = vmatprep.subr.mxu0 0.0
    %249 = vmatpush1.msra.mxu0 0.0
    %250 = vmatprep.subr.mxu0 0.0
    %251 = vmatpush1.msra.mxu0 0.0
    %252 = vmatprep.subr.mxu0 0.0
    %253 = vmatpush1.msra.mxu0 0.0
    %254 = vmatprep.subr.mxu0 0.0
    %255 = vmatpush1.msra.mxu0 0.0
    %256 = vmatprep.subr.mxu0 0.0
    %257 = vmatpush1.msra.mxu0 0.0
    %258 = vmatprep.subr.mxu0 0.0
    %259 = vmatpush1.msra.mxu0 0.0
    %260 = vmatprep.subr.mxu0 0.0
    %261 = vmatpush1.msra.mxu0 0.0
    %262 = vmatprep.subr.mxu0 0.0
    %263 = vmatpush1.msra.mxu0 0.0
    %264 = vmatprep.subr.mxu0 0.0
    %265 = vmatpush1.msra.mxu0 0.0
    %266 = vmatprep.subr.mxu0 0.0
    %267 = vmatpush1.msra.mxu0 0.0
    %268 = vmatprep.subr.mxu0 0.0
    %269 = vmatpush1.msra.mxu0 0.0
    %270 = vmatprep.subr.mxu0 0.0
    %271 = vmatpush1.msra.mxu0 0.0
    %272 = vmatprep.subr.mxu0 0.0
    %273 = vmatpush1.msra.mxu0 0.0
    %274 = vmatprep.subr.mxu0 0.0
    %275 = vmatpush1.msra.mxu0 0.0
    %276 = vmatprep.subr.mxu0 0.0
    %277 = vmatpush1.msra.mxu0 0.0
    %278 = vmatprep.subr.mxu0 0.0
    %279 = vmatpush1.msra.mxu0 0.0
    %280 = vmatprep.subr.mxu0 0.0
    %281 = vmatpush1.msra.mxu0 0.0
    %282 = vmatprep.subr.mxu0 0.0
    %283 = vmatpush1.msra.mxu0 0.0
    %284 = vmatprep.subr.mxu0 0.0
    %285 = vmatpush1.msra.mxu0 0.0
    %286 = vmatprep.subr.mxu0 0.0
    %287 = vmatpush1.msra.mxu0 0.0
    %288 = vmatprep.subr.mxu0 0.0
    %289 = vmatpush1.msra.mxu0 0.0
    %290 = vmatprep.subr.mxu0 0.0
    %291 = vmatpush1.msra.mxu0 0.0
    %292 = vmatprep.subr.mxu0 0.0
    %293 = vmatpush1.msra.mxu0 0.0
    %294 = vmatprep.subr.mxu0 0.0
    %295 = vmatpush1.msra.mxu0 0.0
    %296 = vmatprep.subr.mxu0 0.0
    %297 = vmatpush1.msra.mxu0 0.0
    %298 = vmatprep.subr.mxu0 0.0
    %299 = vmatpush1.msra.mxu0 0.0
    %300 = vmatprep.subr.mxu0 0.0
    %301 = vmatpush1.msra.mxu0 0.0
    %302 = vmatprep.subr.mxu0 0.0
    %303 = vmatpush1.msra.mxu0 0.0
    %304 = vmatprep.subr.mxu0 0.0
    %305 = vmatpush1.msra.mxu0 0.0
    %306 = vmatprep.subr.mxu0 0.0
    %307 = vmatpush1.msra.mxu0 0.0
    %308 = vmatprep.mubr.f32.mxu0 0.0
    %309 = vmatmul.mubr.f32.gmra.mrb[0].mxu0 %v242
    %v310 = vpop.f32.mrb[0].mxu0
    %v311 = vadd.f32 0.0, %v310
    %v312 = vpop.f32.mrb[0].mxu0
    %313 = vdwg.mxu0
    %v314 = vsel %vm241, %v237, 0
    %316 = vmatprep.subr.mxu0 0.0
    %317 = vmatpush1.msra.mxu0 %v47
    %318 = vmatprep.subr.mxu0 0.0
    %319 = vmatpush1.msra.mxu0 0.0
    %320 = vmatprep.subr.mxu0 0.0
    %321 = vmatpush1.msra.mxu0 0.0
    %322 = vmatprep.subr.mxu0 0.0
    %323 = vmatpush1.msra.mxu0 0.0
    %324 = vmatprep.subr.mxu0 0.0
    %325 = vmatpush1.msra.mxu0 0.0
    %326 = vmatprep.subr.mxu0 0.0
    %327 = vmatpush1.msra.mxu0 0.0
    %328 = vmatprep.subr.mxu0 0.0
    %329 = vmatpush1.msra.mxu0 0.0
    %330 = vmatprep.subr.mxu0 0.0
    %331 = vmatpush1.msra.mxu0 0.0
    %332 = vmatprep.subr.mxu0 0.0
    %333 = vmatpush1.msra.mxu0 0.0
    %334 = vmatprep.subr.mxu0 0.0
    %335 = vmatpush1.msra.mxu0 0.0
    %336 = vmatprep.subr.mxu0 0.0
    %337 = vmatpush1.msra.mxu0 0.0
    %338 = vmatprep.subr.mxu0 0.0
    %339 = vmatpush1.msra.mxu0 0.0
    %340 = vmatprep.subr.mxu0 0.0
    %341 = vmatpush1.msra.mxu0 0.0
    %342 = vmatprep.subr.mxu0 0.0
    %343 = vmatpush1.msra.mxu0 0.0
    %344 = vmatprep.subr.mxu0 0.0
    %345 = vmatpush1.msra.mxu0 0.0
    %346 = vmatprep.subr.mxu0 0.0
    %347 = vmatpush1.msra.mxu0 0.0
    %348 = vmatprep.subr.mxu0 0.0
    %349 = vmatpush1.msra.mxu0 0.0
    %350 = vmatprep.subr.mxu0 0.0
    %351 = vmatpush1.msra.mxu0 0.0
    %352 = vmatprep.subr.mxu0 0.0
    %353 = vmatpush1.msra.mxu0 0.0
    %354 = vmatprep.subr.mxu0 0.0
    %355 = vmatpush1.msra.mxu0 0.0
    %356 = vmatprep.subr.mxu0 0.0
    %357 = vmatpush1.msra.mxu0 0.0
    %358 = vmatprep.subr.mxu0 0.0
    %359 = vmatpush1.msra.mxu0 0.0
    %360 = vmatprep.subr.mxu0 0.0
    %361 = vmatpush1.msra.mxu0 0.0
    %362 = vmatprep.subr.mxu0 0.0
    %363 = vmatpush1.msra.mxu0 0.0
    %364 = vmatprep.subr.mxu0 0.0
    %365 = vmatpush1.msra.mxu0 0.0
    %366 = vmatprep.subr.mxu0 0.0
    %367 = vmatpush1.msra.mxu0 0.0
    %368 = vmatprep.subr.mxu0 0.0
    %369 = vmatpush1.msra.mxu0 0.0
    %370 = vmatprep.subr.mxu0 0.0
    %371 = vmatpush1.msra.mxu0 0.0
    %372 = vmatprep.subr.mxu0 0.0
    %373 = vmatpush1.msra.mxu0 0.0
    %374 = vmatprep.subr.mxu0 0.0
    %375 = vmatpush1.msra.mxu0 0.0
    %376 = vmatprep.subr.mxu0 0.0
    %377 = vmatpush1.msra.mxu0 0.0
    %378 = vmatprep.subr.mxu0 0.0
    %379 = vmatpush1.msra.mxu0 0.0
    %380 = vmatprep.mubr.f32.mxu0 0.0
    %381 = vmatmul.mubr.f32.gmra.mrb[0].mxu0 %v314
    %v382 = vpop.f32.mrb[0].mxu0
    %v383 = vadd.f32 0.0, %v382
    %v384 = vpop.f32.mrb[0].mxu0
    %385 = vdwg.mxu0
    %v388 = vrot.slane %v383, 7
    %v389 = vsel %vm163, %v388, %v311
    %vm391 = vcmask 254976
    %392 = vst.msk [vmem:[#allocation7] sm:$0x3] %vm391, %v389
    // Predicated region
    $region22: #{tpu_custom_call.1} parent=1 // pred_check
      _
    $region23: #{tpu_custom_call.1} parent=1 // pred_check_branch
      %394 = sbr.rel (0) target = $region25
    $region24: #{tpu_custom_call.1} parent=1 // pred_region
      %s396 = ssub.s32 32, 32
      %397 = vsyncadd [#allocation4], %s396
      %s399 = sshll.u32 [#allocation7], 4
      %s400 = int_to_ptr.vmem [resolvable:$true] %s399
      %402 = dma.vmem_to_hbm [thread:$0]  %s400, 32, %s3, [#allocation4]
    $region25: #{tpu_custom_call.1} parent=1 // pred_fallthru
      _
    // Predicated region
    $region26: #{tpu_custom_call.1} parent=1 // pred_check
      _
    $region27: #{tpu_custom_call.1} parent=1 // pred_check_branch
      %404 = sbr.rel (0) target = $region29
    $region28: #{tpu_custom_call.1} parent=1 // pred_region
      %s406 = ssub.s32 32, 32
      %407 = vsyncadd [#allocation9], %s406
      %s409 = sshll.u32 [#allocation8], 4
      %s410 = int_to_ptr.vmem [resolvable:$true] %s409
      %412 = dma.vmem_to_hbm [thread:$0]  %s410, 32, %s4, [#allocation9]
    $region29: #{tpu_custom_call.1} parent=1 // pred_fallthru
      _
    // Predicated region
    $region30: #{tpu_custom_call.1} parent=1 // pred_check
      _
    $region31: #{tpu_custom_call.1} parent=1 // pred_check_branch
      %414 = sbr.rel (0) target = $region33
    $region32: #{tpu_custom_call.1} parent=1 // pred_region
      %415 = dma.done [#allocation4], 32
    $region33: #{tpu_custom_call.1} parent=1 // pred_fallthru
      _
    // Predicated region
    $region34: #{tpu_custom_call.1} parent=1 // pred_check
      _
    $region35: #{tpu_custom_call.1} parent=1 // pred_check_branch
      %417 = sbr.rel (0) target = $region37
    $region36: #{tpu_custom_call.1} parent=1 // pred_region
      %418 = dma.done [#allocation9], 32
    $region37: #{tpu_custom_call.1} parent=1 // pred_fallthru
      _
    %419 = vsyncpa [#allocation3], 1
    %420 = vsyncpa [#allocation6], 1
    %421 = vsyncpa [#allocation4], 1
    %422 = vsyncpa [#allocation9], 1

</llo_original>
